<compile_context>
chip_gen: v7x
topology: tpu7x:2x2x1
jax: 0.10.0
libtpu: 0.0.40
codegen_flags: <defaults>
</compile_context>

<pallas_src>
import jax
import jax.numpy as jnp
from jax.experimental import pallas as pl
from jax.experimental.pallas import tpu as pltpu


def orientation_gate_kernel(alpha_ref, x_ref, o_ref):
    # alpha_ref: (tr, 1) f32 per-row gain; x_ref / o_ref: (tr, thw) tile.
    # Single fused VPU multiply (f32), cast back to the output dtype.
    o_ref[...] = (x_ref[...].astype(jnp.float32) * alpha_ref[...]).astype(o_ref.dtype)


def orientation_gate(x, alpha_logits, *, donate_input=False):
    """x: (B, C, H, W), alpha_logits: (gsize,) float logits.

    Set donate_input=True only when the caller no longer needs x: the output HBM
    buffer then aliases the input (memory-footprint win inside a larger model).
    """
    B, C, H, W = x.shape
    gsize = alpha_logits.shape[0]
    if C % gsize:
        # Module returns the input unchanged when channels aren't a multiple of gsize.
        return x
    n_rep = C // gsize
    hw = H * W
    N = B * C
    itemsize = jnp.dtype(x.dtype).itemsize

    # Per-row gain: row r = (b, c) with c = r % C, gain[r] = sigmoid(alpha)[c % gsize],
    # i.e. jnp.tile (rep-major, group-minor, then batch-major) — NOT jnp.repeat.
    gain = jax.nn.sigmoid(alpha_logits.astype(jnp.float32))          # (gsize,) f32
    gain_rows = jnp.tile(gain, B * n_rep).reshape(N, 1)              # (B*C, 1) f32, tiny

    x2 = x.reshape(N, hw)                                            # free metadata reshape

    # ---- VMEM budget / tile sizing --------------------------------------------------------
    try:
        vmem_cap = int(pltpu.get_tpu_info().vmem_capacity_bytes)     # 128 MiB v5e/v6e, 64 MiB v7x
    except Exception:
        vmem_cap = 64 * 1024 * 1024                                  # conservative fallback
    vmem_limit = (vmem_cap * 3) // 4                                 # headroom for compiler scratch
    block_budget = vmem_limit // 8                                   # 2 streams x 2 buffers + slack

    row_bytes = hw * itemsize
    max_rows = max(1, block_budget // row_bytes)
    if max_rows >= N:
        tr = N                                                       # full dim -> always legal
    elif max_rows >= 8:
        tr = (max_rows // 8) * 8                                     # sublane-aligned row tile
    else:
        tr = min(8, N)                                               # minimal row tile

    # Secondary hw tiling only when even the minimal row block exceeds the budget (huge H*W).
    if tr * row_bytes <= block_budget or hw <= 128:
        thw = hw                                                     # full dim -> exempt from /128 rule
    else:
        thw = max(128, (block_budget // (tr * itemsize)) // 128 * 128)
        thw = min(thw, hw)

    grid_rows = pl.cdiv(N, tr)
    grid_hw = pl.cdiv(hw, thw)

    # v7x: two TensorCores share the grid -> avoid odd multi-step grids (up to ~33% imbalance).
    # Best effort: enlarge the row tile so the total step count becomes even.
    if grid_rows >= 3 and (grid_rows * grid_hw) % 2 == 1 and tr < N:
        tr_even = ((pl.cdiv(N, grid_rows - 1) + 7) // 8) * 8
        if pl.cdiv(N, tr_even) % 2 == 0:
            tr = tr_even
            grid_rows = pl.cdiv(N, tr)

    extra = {}
    if donate_input:
        extra["input_output_aliases"] = {1: 0}                       # x2 (operand 1) -> output 0

    out2 = pl.pallas_call(
        orientation_gate_kernel,
        out_shape=jax.ShapeDtypeStruct((N, hw), x.dtype),
        grid_spec=pltpu.PrefetchScalarGridSpec(
            num_scalar_prefetch=0,
            grid=(grid_rows, grid_hw),
            in_specs=[
                # gain: constant block index along the inner hw axis -> no re-DMA per step
                pl.BlockSpec((tr, 1), lambda i, j: (i, 0)),
                pl.BlockSpec((tr, thw), lambda i, j: (i, j)),
            ],
            out_specs=pl.BlockSpec((tr, thw), lambda i, j: (i, j)),
        ),
        compiler_params=pltpu.CompilerParams(
            dimension_semantics=("parallel", "parallel"),
            vmem_limit_bytes=vmem_limit,
        ),
        **extra,
    )(gain_rows, x2)

    return out2.reshape(B, C, H, W)


def _reference(x, alpha_logits, gsize):
    B, C, H, W = x.shape
    n_rep = C // gsize
    alpha = jax.nn.sigmoid(alpha_logits).reshape(1, 1, gsize, 1, 1)
    return (x.reshape(B, n_rep, gsize, H, W) * alpha).reshape(B, C, H, W)


if __name__ == "__main__":
    key = jax.random.PRNGKey(0)
    kx, ka, kx2 = jax.random.split(key, 3)

    # Case 1: the module's nominal small shape.
    B, gsize, n_rep, H, W = 2, 4, 2, 16, 16
    C = gsize * n_rep
    x = jax.random.normal(kx, (B, C, H, W), dtype=jnp.float32)
    # nn.Parameter(torch.zeros(gsize)) in __init__; use nonzero values so the gate is
    # exercised non-trivially.
    alpha_logits = jax.random.normal(ka, (gsize,), dtype=jnp.float32)

    out = jax.block_until_ready(orientation_gate(x, alpha_logits))
    ref = _reference(x, alpha_logits, gsize)
    assert out.shape == x.shape and out.dtype == x.dtype
    assert jnp.allclose(out, ref, atol=1e-6, rtol=1e-6)

    # Case 2: H*W not a multiple of 128 (exercises the no-pad, masked-tail-store path).
    B2, H2, W2 = 3, 14, 14
    x2 = jax.random.normal(kx2, (B2, C, H2, W2), dtype=jnp.float32)
    out2 = jax.block_until_ready(orientation_gate(x2, alpha_logits))
    ref2 = _reference(x2, alpha_logits, gsize)
    assert out2.shape == x2.shape and out2.dtype == x2.dtype
    assert jnp.allclose(out2, ref2, atol=1e-6, rtol=1e-6)

    print("KERNEL_OK")
</pallas_src>

<mosaic_0001>
module attributes {stable_mosaic.version = 11 : i64} {
  func.func @orientation_gate_kernel(%arg0: i32, %arg1: i32, %arg2: memref<16x1xf32, #tpu.memory_space<vmem>>, %arg3: memref<16x256xf32, #tpu.memory_space<vmem>>, %arg4: memref<16x256xf32, #tpu.memory_space<vmem>>) attributes {dimension_semantics = [#tpu.dimension_semantics<parallel>, #tpu.dimension_semantics<parallel>], iteration_bounds = array<i64: 1, 1>, scalar_prefetch = 0 : i64, scratch_operands = 0 : i64, tpu.core_type = #tpu.core_type<tc>, window_params = [{transform_indices = @transform_0, window_bounds = array<i64: 16, 1>}, {transform_indices = @transform_1, window_bounds = array<i64: 16, 256>}, {transform_indices = @transform_2, window_bounds = array<i64: 16, 256>}]} {
    %c0 = arith.constant 0 : index
    %c0_0 = arith.constant 0 : index
    %0 = vector.load %arg3[%c0, %c0_0] : memref<16x256xf32, #tpu.memory_space<vmem>>, vector<16x256xf32>
    %c0_1 = arith.constant 0 : index
    %c0_2 = arith.constant 0 : index
    %1 = vector.load %arg2[%c0_1, %c0_2] : memref<16x1xf32, #tpu.memory_space<vmem>>, vector<16x1xf32>
    %2 = vector.broadcast %1 : vector<16x1xf32> to vector<16x256xf32>
    %3 = arith.mulf %0, %2 : vector<16x256xf32>
    %c0_3 = arith.constant 0 : index
    %c0_4 = arith.constant 0 : index
    %4 = vector.load %arg4[%c0_3, %c0_4] : memref<16x256xf32, #tpu.memory_space<vmem>>, vector<16x256xf32>
    tpu.vector_store %arg4[%c0_3, %c0_4], %3 {strides = array<i32>} : memref<16x256xf32, #tpu.memory_space<vmem>>, vector<16x256xf32>,
    return
  }
  func.func @transform_0(%arg0: i32, %arg1: i32) -> (i32, i32) {
    %c0_i32 = arith.constant 0 : i32
    %c0_i32_0 = arith.constant 0 : i32
    return %arg0, %c0_i32 : i32, i32
  }
  func.func @transform_1(%arg0: i32, %arg1: i32) -> (i32, i32) {
    %c0_i32 = arith.constant 0 : i32
    return %arg0, %arg1 : i32, i32
  }
  func.func @transform_2(%arg0: i32, %arg1: i32) -> (i32, i32) {
    %c0_i32 = arith.constant 0 : i32
    return %arg0, %arg1 : i32, i32
  }
}

</mosaic_0001>

<llo_original>
// kernel: tpu_custom_call.1
$region0: #{tpu_custom_call.1}
  #allocation0 [shape = 'u32[]', space=smem, size = 0x4, offset = 0x4, fixed_abs, tag = 'smem constant byte address 0x4 - core index']
  #allocation1 [shape = 'u32[144,128]{1,0:T(1,128)}', space=vmem, size = 0x12000, scoped, tag = 'internal scratch']
  %s0 = inlined_call_operand.vmem [shape: f32[16,1], index: 0, kind: input, shape index: {}]
  %s1 = inlined_call_operand.hbm [shape: f32[16,256], index: 1, kind: input, shape index: {}]
  %s2 = inlined_call_operand.hbm [shape: f32[16,256], index: 2, kind: output, shape index: {}]
  %s3 = sld [smem:[#allocation0]]
  $region22: #{tpu_custom_call.1} parent=0
    _
  %s5 = ssub.s32 1, %s3
  %s6 = scalar_select 0, %s5, %s3
  $region1: #{tpu_custom_call.1} parent=0
    #allocation2 [shape = 'u8[16384]{0}', space=vmem, size = 0x4000, scoped, tag = 'input window, operand 1, single buffered']
    #allocation3 [shape = 's32[1]{0}', space=sflag, size = 0x4, scoped, tag = 'scoped memory for tpu_custom_call.1']
    #allocation4 [shape = 's32[1]{0}', space=sflag, size = 0x4, scoped, tag = 'scoped memory for tpu_custom_call.1']
    #allocation5 [shape = 'u8[16384]{0}', space=vmem, size = 0x4000, scoped, tag = 'output window, operand 0, single buffered']
    %7 = vsyncpa [#allocation3], 0
    %8 = vsyncpa [#allocation4], 0
    // Predicated region
    $region2: #{tpu_custom_call.1} parent=1 // pred_check
      _
    $region3: #{tpu_custom_call.1} parent=1 // pred_check_branch
      %10 = sbr.rel (0) target = $region5
    $region4: #{tpu_custom_call.1} parent=1 // pred_region
      _
    $region5: #{tpu_custom_call.1} parent=1 // pred_fallthru
      _
    // Predicated region
    $region6: #{tpu_custom_call.1} parent=1 // pred_check
      _
    $region7: #{tpu_custom_call.1} parent=1 // pred_check_branch
      %12 = sbr.rel (0) target = $region9
    $region8: #{tpu_custom_call.1} parent=1 // pred_region
      %s14 = ssub.s32 512, 512
      %15 = vsyncadd [#allocation3], %s14
      %s16 = sshll.u32 [#allocation2], 4
      %s17 = int_to_ptr.vmem [resolvable:$true] %s16
      %22 = dma.hbm_to_vmem [thread:$0]  %s1, 512, %s17, [#allocation3], 256, 256, 16
    $region9: #{tpu_custom_call.1} parent=1 // pred_fallthru
      _
    // Predicated region
    $region10: #{tpu_custom_call.1} parent=1 // pred_check
      _
    $region11: #{tpu_custom_call.1} parent=1 // pred_check_branch
      %24 = sbr.rel (0) target = $region13
    $region12: #{tpu_custom_call.1} parent=1 // pred_region
      %25 = dma.done [#allocation3], 512
    $region13: #{tpu_custom_call.1} parent=1 // pred_fallthru
      _
    %v26 = vld [vmem:[#allocation2] sm:$0xff]
    %v27 = vld [vmem:[#allocation2 + $0x8] sm:$0xff]
    %v28 = vld [vmem:[#allocation2 + $0x10] sm:$0xff]
    %v29 = vld [vmem:[#allocation2 + $0x18] sm:$0xff]
    %v30 = vld [vmem:[%s0] sm:$0xff]
    %v31 = vld [vmem:[%s0 + $0x8] sm:$0xff]
    %33 = vset.pattern.permute.xlu0 0
    %34 = vperm.xlu0 %33, %v30
    %v35 = vpop.permute.xlu0 %34
    %38 = vset.pattern.permute.xlu0 0
    %39 = vperm.xlu0 %38, %v31
    %v40 = vpop.permute.xlu0 %39
    %v42 = vmul.f32 %v26, %v35
    %v43 = vmul.f32 %v27, %v35
    %v44 = vmul.f32 %v28, %v40
    %v45 = vmul.f32 %v29, %v40
    %46 = vst [vmem:[#allocation5] sm:$0xff] %v42
    %47 = vst [vmem:[#allocation5 + $0x8] sm:$0xff] %v43
    %48 = vst [vmem:[#allocation5 + $0x10] sm:$0xff] %v44
    %49 = vst [vmem:[#allocation5 + $0x18] sm:$0xff] %v45
    // Predicated region
    $region14: #{tpu_custom_call.1} parent=1 // pred_check
      _
    $region15: #{tpu_custom_call.1} parent=1 // pred_check_branch
      %51 = sbr.rel (0) target = $region17
    $region16: #{tpu_custom_call.1} parent=1 // pred_region
      %s53 = ssub.s32 512, 512
      %54 = vsyncadd [#allocation4], %s53
      %s55 = sshll.u32 [#allocation5], 4
      %s56 = int_to_ptr.vmem [resolvable:$true] %s55
      %61 = dma.vmem_to_hbm [thread:$0]  %s56, 512, %s2, [#allocation4], 256, 256, 16
    $region17: #{tpu_custom_call.1} parent=1 // pred_fallthru
      _
    // Predicated region
    $region18: #{tpu_custom_call.1} parent=1 // pred_check
      _
    $region19: #{tpu_custom_call.1} parent=1 // pred_check_branch
      %63 = sbr.rel (0) target = $region21
    $region20: #{tpu_custom_call.1} parent=1 // pred_region
      %64 = dma.done [#allocation4], 512
    $region21: #{tpu_custom_call.1} parent=1 // pred_fallthru
      _
    %65 = vsyncpa [#allocation3], 1
    %66 = vsyncpa [#allocation4], 1

</llo_original>
